<compile_context>
chip_gen: v6e
topology: v6e:2x2x1
jax: 0.10.0
libtpu: 0.0.40
codegen_flags: <defaults>
</compile_context>

<pallas_src>
import jax
import jax.numpy as jnp
from jax.experimental import pallas as pl
from jax.experimental.pallas import tpu as pltpu

EPS = 1e-8
_MIB = 1024 * 1024


def _vmem_capacity_bytes():
    try:
        return int(pltpu.get_tpu_info().vmem_capacity_bytes)
    except Exception:
        return 64 * _MIB  # conservative fallback (v7x per-TC VMEM)


def _make_wasl_kernel(n_rows, steps_per_shard, needs_row_mask, eps):
    """Builds the kernel body for a (num_shards, steps_per_shard) grid."""

    def kernel(x_ref, y_ref, s_ref, loss_ref, mask_ref):
        i = pl.program_id(0)  # parallel shard axis (megacore on v7x)
        j = pl.program_id(1)  # arbitrary reduction axis over batch tiles

        # Output blocks are resident in VMEM across the reduction axis j;
        # use them directly as (1, 8, C) accumulators.
        @pl.when(j == 0)
        def _():
            loss_ref[...] = jnp.zeros_like(loss_ref)
            mask_ref[...] = jnp.zeros_like(mask_ref)

        x_nat = x_ref[...]                   # (tb, C) native dtype
        y_nat = y_ref[...]                   # (tb, C) native dtype
        tb, c = x_nat.shape

        # Compare on the native dtype (packed vregs for bf16) before the
        # f32 upcast -> half the vreg traffic for the mask path on bf16.
        valid = y_nat != jnp.asarray(-1.0, dtype=y_nat.dtype)

        if needs_row_mask:
            # Partial last block and/or phantom block from the odd-block 2-way
            # shard: mask off rows >= N.  Built as a (tb, 1) column (tb ops,
            # not tb*C) and broadcast into the AND.
            row0 = (i * steps_per_shard + j) * tb
            rows = row0 + jax.lax.broadcasted_iota(jnp.int32, (tb, 1), 0)
            valid = jnp.logical_and(valid, rows < n_rows)

        x = x_nat.astype(jnp.float32)
        y = y_nat.astype(jnp.float32)
        scale = s_ref[...]                   # (1, C) = weight / C (f32)

        # los_pos + neg_weight * los_neg, with neg_weight = 1 - (1 - x) = x.
        log_pos = jnp.log(jnp.maximum(x, eps))
        log_neg = jnp.log(jnp.maximum(1.0 - x, eps))
        loss = (y * log_pos + x * (1.0 - y) * log_neg) * scale
        loss = jnp.where(valid, loss, 0.0)   # true select: garbage tails stay 0
        cnt = jnp.where(valid, 1.0, 0.0)

        # Fold (tb, C) -> (8, C): elementwise adds along the batch axis only
        # (no cross-lane reduce in the hot loop).
        loss_ref[...] += loss.reshape(tb // 8, 8, c).sum(axis=0)[None]
        mask_ref[...] += cnt.reshape(tb // 8, 8, c).sum(axis=0)[None]

    return kernel


def weighted_asymmetric_loss(x, y, weight=None, *, tb=None, eps=EPS):
    """x, y: (N, C) float32 or bfloat16; weight: (C,) or None. Returns scalar f32."""
    n, c = x.shape
    isx = jnp.dtype(x.dtype).itemsize
    isy = jnp.dtype(y.dtype).itemsize
    sub = {4: 8, 2: 16, 1: 32}.get(min(isx, isy), 8)

    # Per-generation VMEM sizing: working-set budget for the batch tile and
    # the scoped-VMEM limit handed to Mosaic.
    vmem_cap = _vmem_capacity_bytes()
    if vmem_cap >= 128 * _MIB:          # v5e / v6e (128 MiB physical)
        work_budget = 80 * _MIB
        vmem_limit = 96 * _MIB
    else:                               # v7x (64 MiB per TensorCore)
        work_budget = 40 * _MIB
        vmem_limit = 48 * _MIB

    if tb is None:
        # Per-row VMEM cost: x+y double-buffered at native dtype, plus ~4
        # f32-wide intermediates (upcasts + loss/cnt temporaries).
        per_row_bytes = 2 * c * (isx + isy) + 4 * c * 4
        tb = max(sub, work_budget // per_row_bytes)
    n_up = -(-n // sub) * sub
    tb = min(tb, n_up)
    tb = max(sub, (tb // sub) * sub)

    total_blocks = pl.cdiv(n, tb)
    # Always 2-way shard the leading ("parallel") axis when there are >= 2
    # blocks: uses both TensorCores on v7x; near-neutral on single-TC chips.
    num_shards = 2 if total_blocks >= 2 else 1
    steps = pl.cdiv(total_blocks, num_shards)
    needs_row_mask = (n % tb != 0) or (num_shards * steps != total_blocks)

    # Fold 1/C and the per-class weight into one resident scale vector.
    if weight is None:
        scale = jnp.full((1, c), 1.0 / c, dtype=jnp.float32)
    else:
        scale = (weight.astype(jnp.float32) / c).reshape(1, c)

    kernel = _make_wasl_kernel(n, steps, needs_row_mask, eps)

    last_block = total_blocks - 1

    def in_map(i, j):
        # Clamp phantom blocks (odd block-count on the 2-shard split) to a
        # real block; their rows are zeroed by the row-validity mask, which
        # uses the *unclamped* block index.
        return (jnp.minimum(i * steps + j, last_block), 0)

    loss_part, mask_part = pl.pallas_call(
        kernel,
        out_shape=(
            jax.ShapeDtypeStruct((num_shards, 8, c), jnp.float32),
            jax.ShapeDtypeStruct((num_shards, 8, c), jnp.float32),
        ),
        grid_spec=pltpu.PrefetchScalarGridSpec(
            num_scalar_prefetch=0,
            grid=(num_shards, steps),
            in_specs=[
                pl.BlockSpec((tb, c), in_map),                   # x
                pl.BlockSpec((tb, c), in_map),                   # y
                pl.BlockSpec((1, c), lambda i, j: (0, 0)),       # weight/C
            ],
            out_specs=[
                pl.BlockSpec((1, 8, c), lambda i, j: (i, 0, 0)),
                pl.BlockSpec((1, 8, c), lambda i, j: (i, 0, 0)),
            ],
        ),
        compiler_params=pltpu.CompilerParams(
            dimension_semantics=("parallel", "arbitrary"),
            vmem_limit_bytes=vmem_limit,
        ),
    )(x, y, scale)

    # Final cross-lane reduce + (-sum/sum) finish over tiny partials.
    return -(jnp.sum(loss_part) / jnp.sum(mask_part))


def _reference(x, y, weight):
    mask = (y != -1.0).astype(jnp.float32)
    los_pos = y * jnp.log(jnp.maximum(x, EPS))
    los_neg = (1.0 - y) * jnp.log(jnp.maximum(1.0 - x, EPS))
    loss = los_pos + x * los_neg
    loss = loss * mask
    if weight is not None:
        loss = loss * weight.reshape(1, -1)
    loss = loss.mean(axis=-1)
    return -jnp.sum(loss) / jnp.sum(mask)


if __name__ == "__main__":
    key = jax.random.PRNGKey(0)
    kx, ky, kw = jax.random.split(key, 3)

    # Primary check: small f32, auto tile, single block.
    N, C = 16, 128
    x = jax.random.uniform(kx, (N, C), jnp.float32, minval=0.01, maxval=0.99)
    y = jax.random.randint(ky, (N, C), -1, 2).astype(jnp.float32)   # {-1,0,1}
    weight = jax.random.uniform(kw, (C,), jnp.float32, minval=0.5, maxval=1.5)

    out = weighted_asymmetric_loss(x, y, weight)
    out = jax.block_until_ready(out)
    ref = _reference(x, y, weight)
    assert jnp.allclose(out, ref, rtol=1e-5, atol=1e-6), (out, ref)

    # Secondary check: bf16 inputs, multi-block grid (even block count, 2-way
    # shard), N not divisible by the batch tile (partial-block row mask).
    N2, C2 = 200, 128
    kx2, ky2 = jax.random.split(kx)
    x2 = jax.random.uniform(kx2, (N2, C2), jnp.float32, minval=0.01, maxval=0.99)
    y2 = jax.random.randint(ky2, (N2, C2), -1, 2).astype(jnp.float32)
    x2_bf = x2.astype(jnp.bfloat16)
    y2_bf = y2.astype(jnp.bfloat16)

    out2 = weighted_asymmetric_loss(x2_bf, y2_bf, weight, tb=64)
    out2 = jax.block_until_ready(out2)
    ref2 = _reference(x2_bf.astype(jnp.float32), y2_bf.astype(jnp.float32), weight)
    assert jnp.allclose(out2, ref2, rtol=1e-4, atol=1e-5), (out2, ref2)

    # Tertiary check: odd block count (ceil(200/80)=3) -> phantom block on the
    # 2-way shard must be fully masked; also covers weight=None.
    out3 = weighted_asymmetric_loss(x2, y2, None, tb=80)
    out3 = jax.block_until_ready(out3)
    ref3 = _reference(x2, y2, None)
    assert jnp.allclose(out3, ref3, rtol=1e-5, atol=1e-6), (out3, ref3)

    print("KERNEL_OK")
</pallas_src>

<mosaic_0001>
module attributes {stable_mosaic.version = 11 : i64} {
  func.func @kernel(%arg0: i32, %arg1: i32, %arg2: memref<16x128xf32, #tpu.memory_space<vmem>>, %arg3: memref<16x128xf32, #tpu.memory_space<vmem>>, %arg4: memref<1x128xf32, #tpu.memory_space<vmem>>, %arg5: memref<1x8x128xf32, #tpu.memory_space<vmem>>, %arg6: memref<1x8x128xf32, #tpu.memory_space<vmem>>) attributes {dimension_semantics = [#tpu.dimension_semantics<parallel>, #tpu.dimension_semantics<arbitrary>], iteration_bounds = array<i64: 1, 1>, scalar_prefetch = 0 : i64, scratch_operands = 0 : i64, tpu.core_type = #tpu.core_type<tc>, window_params = [{transform_indices = @transform_0, window_bounds = array<i64: 16, 128>}, {transform_indices = @transform_1, window_bounds = array<i64: 16, 128>}, {pipeline_mode = #tpu.pipeline_mode<synchronous>, transform_indices = @transform_2, window_bounds = array<i64: 1, 128>}, {transform_indices = @transform_3, window_bounds = array<i64: 1, 8, 128>}, {transform_indices = @transform_4, window_bounds = array<i64: 1, 8, 128>}]} {
    %c0_i32 = arith.constant 0 : i32
    %0 = arith.cmpi eq, %arg1, %c0_i32 : i32
    %1 = arith.extui %0 : i1 to i32
    %c0_i32_0 = arith.constant 0 : i32
    %2 = arith.cmpi ne, %1, %c0_i32_0 : i32
    scf.if %2 {
      %cst_27 = arith.constant 0.000000e+00 : f32
      %41 = vector.broadcast %cst_27 : f32 to vector<1x8x128xf32>
      %c0_28 = arith.constant 0 : index
      %c0_29 = arith.constant 0 : index
      %c0_30 = arith.constant 0 : index
      %42 = vector.load %arg5[%c0_28, %c0_29, %c0_30] : memref<1x8x128xf32, #tpu.memory_space<vmem>>, vector<1x8x128xf32>
      tpu.vector_store %arg5[%c0_28, %c0_29, %c0_30], %41 {strides = array<i32>} : memref<1x8x128xf32, #tpu.memory_space<vmem>>, vector<1x8x128xf32>,
      %cst_31 = arith.constant 0.000000e+00 : f32
      %43 = vector.broadcast %cst_31 : f32 to vector<1x8x128xf32>
      %c0_32 = arith.constant 0 : index
      %c0_33 = arith.constant 0 : index
      %c0_34 = arith.constant 0 : index
      %44 = vector.load %arg6[%c0_32, %c0_33, %c0_34] : memref<1x8x128xf32, #tpu.memory_space<vmem>>, vector<1x8x128xf32>
      tpu.vector_store %arg6[%c0_32, %c0_33, %c0_34], %43 {strides = array<i32>} : memref<1x8x128xf32, #tpu.memory_space<vmem>>, vector<1x8x128xf32>,
    } else {
    }
    %c0 = arith.constant 0 : index
    %c0_1 = arith.constant 0 : index
    %3 = vector.load %arg2[%c0, %c0_1] : memref<16x128xf32, #tpu.memory_space<vmem>>, vector<16x128xf32>
    %c0_2 = arith.constant 0 : index
    %c0_3 = arith.constant 0 : index
    %4 = vector.load %arg3[%c0_2, %c0_3] : memref<16x128xf32, #tpu.memory_space<vmem>>, vector<16x128xf32>
    %cst = arith.constant -1.000000e+00 : f32
    %5 = vector.broadcast %cst : f32 to vector<16x128xf32>
    %6 = arith.cmpf one, %4, %5 : vector<16x128xf32>
    %c0_4 = arith.constant 0 : index
    %c0_5 = arith.constant 0 : index
    %7 = vector.load %arg4[%c0_4, %c0_5] : memref<1x128xf32, #tpu.memory_space<vmem>>, vector<1x128xf32>
    %cst_6 = arith.constant 9.99999993E-9 : f32
    %8 = vector.broadcast %cst_6 : f32 to vector<16x128xf32>
    %9 = arith.maximumf %3, %8 : vector<16x128xf32>
    %10 = math.log %9 : vector<16x128xf32>
    %cst_7 = arith.constant 1.000000e+00 : f32
    %11 = vector.broadcast %cst_7 : f32 to vector<16x128xf32>
    %12 = arith.subf %11, %3 : vector<16x128xf32>
    %cst_8 = arith.constant 9.99999993E-9 : f32
    %13 = vector.broadcast %cst_8 : f32 to vector<16x128xf32>
    %14 = arith.maximumf %12, %13 : vector<16x128xf32>
    %15 = math.log %14 : vector<16x128xf32>
    %16 = arith.mulf %4, %10 : vector<16x128xf32>
    %cst_9 = arith.constant 1.000000e+00 : f32
    %17 = vector.broadcast %cst_9 : f32 to vector<16x128xf32>
    %18 = arith.subf %17, %4 : vector<16x128xf32>
    %19 = arith.mulf %3, %18 : vector<16x128xf32>
    %20 = arith.mulf %19, %15 : vector<16x128xf32>
    %21 = arith.addf %16, %20 : vector<16x128xf32>
    %22 = vector.broadcast %7 : vector<1x128xf32> to vector<16x128xf32>
    %23 = arith.mulf %21, %22 : vector<16x128xf32>
    %cst_10 = arith.constant 0.000000e+00 : f32
    %24 = vector.broadcast %cst_10 : f32 to vector<16x128xf32>
    %25 = arith.select %6, %23, %24 : vector<16x128xi1>, vector<16x128xf32>
    %cst_11 = arith.constant 1.000000e+00 : f32
    %cst_12 = arith.constant 0.000000e+00 : f32
    %26 = vector.broadcast %cst_11 : f32 to vector<16x128xf32>
    %27 = vector.broadcast %cst_12 : f32 to vector<16x128xf32>
    %28 = arith.select %6, %26, %27 : vector<16x128xi1>, vector<16x128xf32>
    %c0_13 = arith.constant 0 : index
    %c0_14 = arith.constant 0 : index
    %c0_15 = arith.constant 0 : index
    %29 = vector.load %arg5[%c0_13, %c0_14, %c0_15] : memref<1x8x128xf32, #tpu.memory_space<vmem>>, vector<1x8x128xf32>
    %30 = vector.shape_cast %25 : vector<16x128xf32> to vector<2x8x128xf32>
    %cst_16 = arith.constant dense<0.000000e+00> : vector<8x128xf32>
    %31 = vector.multi_reduction <add>, %30, %cst_16 [0] : vector<2x8x128xf32> to vector<8x128xf32>
    %32 = vector.shape_cast %31 : vector<8x128xf32> to vector<1x8x128xf32>
    %33 = arith.addf %29, %32 : vector<1x8x128xf32>
    %c0_17 = arith.constant 0 : index
    %c0_18 = arith.constant 0 : index
    %c0_19 = arith.constant 0 : index
    %34 = vector.load %arg5[%c0_17, %c0_18, %c0_19] : memref<1x8x128xf32, #tpu.memory_space<vmem>>, vector<1x8x128xf32>
    tpu.vector_store %arg5[%c0_17, %c0_18, %c0_19], %33 {strides = array<i32>} : memref<1x8x128xf32, #tpu.memory_space<vmem>>, vector<1x8x128xf32>,
    %c0_20 = arith.constant 0 : index
    %c0_21 = arith.constant 0 : index
    %c0_22 = arith.constant 0 : index
    %35 = vector.load %arg6[%c0_20, %c0_21, %c0_22] : memref<1x8x128xf32, #tpu.memory_space<vmem>>, vector<1x8x128xf32>
    %36 = vector.shape_cast %28 : vector<16x128xf32> to vector<2x8x128xf32>
    %cst_23 = arith.constant dense<0.000000e+00> : vector<8x128xf32>
    %37 = vector.multi_reduction <add>, %36, %cst_23 [0] : vector<2x8x128xf32> to vector<8x128xf32>
    %38 = vector.shape_cast %37 : vector<8x128xf32> to vector<1x8x128xf32>
    %39 = arith.addf %35, %38 : vector<1x8x128xf32>
    %c0_24 = arith.constant 0 : index
    %c0_25 = arith.constant 0 : index
    %c0_26 = arith.constant 0 : index
    %40 = vector.load %arg6[%c0_24, %c0_25, %c0_26] : memref<1x8x128xf32, #tpu.memory_space<vmem>>, vector<1x8x128xf32>
    tpu.vector_store %arg6[%c0_24, %c0_25, %c0_26], %39 {strides = array<i32>} : memref<1x8x128xf32, #tpu.memory_space<vmem>>, vector<1x8x128xf32>,
    return
  }
  func.func @transform_0(%arg0: i32, %arg1: i32) -> (i32, i32) {
    %c1_i32 = arith.constant 1 : i32
    %0 = arith.muli %arg0, %c1_i32 : i32
    %1 = arith.addi %0, %arg1 : i32
    %c0_i32 = arith.constant 0 : i32
    %2 = arith.minsi %1, %c0_i32 : i32
    %c0_i32_0 = arith.constant 0 : i32
    %c0_i32_1 = arith.constant 0 : i32
    return %2, %c0_i32_0 : i32, i32
  }
  func.func @transform_1(%arg0: i32, %arg1: i32) -> (i32, i32) {
    %c1_i32 = arith.constant 1 : i32
    %0 = arith.muli %arg0, %c1_i32 : i32
    %1 = arith.addi %0, %arg1 : i32
    %c0_i32 = arith.constant 0 : i32
    %2 = arith.minsi %1, %c0_i32 : i32
    %c0_i32_0 = arith.constant 0 : i32
    %c0_i32_1 = arith.constant 0 : i32
    return %2, %c0_i32_0 : i32, i32
  }
  func.func @transform_2(%arg0: i32, %arg1: i32) -> (i32, i32) {
    %c0_i32 = arith.constant 0 : i32
    %c0_i32_0 = arith.constant 0 : i32
    %c0_i32_1 = arith.constant 0 : i32
    return %c0_i32, %c0_i32_0 : i32, i32
  }
  func.func @transform_3(%arg0: i32, %arg1: i32) -> (i32, i32, i32) {
    %c0_i32 = arith.constant 0 : i32
    %c0_i32_0 = arith.constant 0 : i32
    %c0_i32_1 = arith.constant 0 : i32
    return %arg0, %c0_i32, %c0_i32_0 : i32, i32, i32
  }
  func.func @transform_4(%arg0: i32, %arg1: i32) -> (i32, i32, i32) {
    %c0_i32 = arith.constant 0 : i32
    %c0_i32_0 = arith.constant 0 : i32
    %c0_i32_1 = arith.constant 0 : i32
    return %arg0, %c0_i32, %c0_i32_0 : i32, i32, i32
  }
}

</mosaic_0001>

<llo_original>
// kernel: tpu_custom_call.1
$region0: #{tpu_custom_call.1}
  #allocation0 [shape = 'u32[]', space=smem, size = 0x4, offset = 0x4, fixed_abs, tag = 'smem constant byte address 0x4 - core index']
  #allocation1 [shape = 'u32[144,128]{1,0:T(1,128)}', space=vmem, size = 0x12000, scoped, tag = 'internal scratch']
  %s0 = inlined_call_operand.hbm [shape: f32[16,128], index: 0, kind: input, shape index: {}]
  %s1 = inlined_call_operand.hbm [shape: f32[16,128], index: 1, kind: input, shape index: {}]
  %s2 = inlined_call_operand.vmem [shape: f32[1,128], index: 2, kind: input, shape index: {}]
  %s3 = inlined_call_operand.hbm [shape: f32[1,8,128], index: 3, kind: output, shape index: {0}]
  %s4 = inlined_call_operand.hbm [shape: f32[1,8,128], index: 4, kind: output, shape index: {1}]
  %5 = xla_tuple %s3, %s4
  %s6 = sld [smem:[#allocation0]]
  $region42: #{tpu_custom_call.1} parent=0
    _
  %s8 = ssub.s32 1, %s6
  %s9 = scalar_select 0, %s8, %s6
  $region1: #{tpu_custom_call.1} parent=0
    #allocation2 [shape = 'u8[8192]{0}', space=vmem, size = 0x2000, scoped, tag = 'input window, operand 0, single buffered']
    #allocation3 [shape = 's32[1]{0}', space=sflag, size = 0x4, scoped, tag = 'scoped memory for tpu_custom_call.1']
    #allocation4 [shape = 's32[1]{0}', space=sflag, size = 0x4, scoped, tag = 'scoped memory for tpu_custom_call.1']
    #allocation5 [shape = 'u8[8192]{0}', space=vmem, size = 0x2000, scoped, tag = 'input window, operand 1, single buffered']
    #allocation6 [shape = 's32[1]{0}', space=sflag, size = 0x4, scoped, tag = 'scoped memory for tpu_custom_call.1']
    #allocation7 [shape = 'u8[4096]{0}', space=vmem, size = 0x1000, scoped, tag = 'output window, operand 0, single buffered']
    #allocation8 [shape = 'u8[4096]{0}', space=vmem, size = 0x1000, scoped, tag = 'output window, operand 1, single buffered']
    #allocation9 [shape = 's32[1]{0}', space=sflag, size = 0x4, scoped, tag = 'scoped memory for tpu_custom_call.1']
    %10 = vsyncpa [#allocation3], 0
    %11 = vsyncpa [#allocation6], 0
    %12 = vsyncpa [#allocation4], 0
    %13 = vsyncpa [#allocation9], 0
    // Predicated region
    $region2: #{tpu_custom_call.1} parent=1 // pred_check
      _
    $region3: #{tpu_custom_call.1} parent=1 // pred_check_branch
      %15 = sbr.rel (0) target = $region5
    $region4: #{tpu_custom_call.1} parent=1 // pred_region
      %s16 = sadd.s32 0, 0
      %p17 = scmp.lt.s32.totalorder %s16, 0
      %s18 = scalar_select %p17, %s16, 0
      %s19 = smul.u32 2, %s18
      %s21 = ssub.s32 256, 256
      %22 = vsyncadd [#allocation3], %s21
      %s23 = smul.addr %s19, 128
      %s24 = scalar_lea.hbm %s0, %s23
      %s25 = sshll.u32 [#allocation2], 4
      %s26 = int_to_ptr.vmem [resolvable:$true] %s25
      %31 = dma.hbm_to_vmem [thread:$0]  %s24, 256, %s26, [#allocation3], 128, 128, 8
    $region5: #{tpu_custom_call.1} parent=1 // pred_fallthru
      _
    // Predicated region
    $region6: #{tpu_custom_call.1} parent=1 // pred_check
      _
    $region7: #{tpu_custom_call.1} parent=1 // pred_check_branch
      %33 = sbr.rel (0) target = $region9
    $region8: #{tpu_custom_call.1} parent=1 // pred_region
      %s34 = sadd.s32 0, 0
      %p35 = scmp.lt.s32.totalorder %s34, 0
      %s36 = scalar_select %p35, %s34, 0
      %s37 = smul.u32 2, %s36
      %s39 = ssub.s32 256, 256
      %40 = vsyncadd [#allocation6], %s39
      %s41 = smul.addr %s37, 128
      %s42 = scalar_lea.hbm %s1, %s41
      %s43 = sshll.u32 [#allocation5], 4
      %s44 = int_to_ptr.vmem [resolvable:$true] %s43
      %49 = dma.hbm_to_vmem [thread:$0]  %s42, 256, %s44, [#allocation6], 128, 128, 8
    $region9: #{tpu_custom_call.1} parent=1 // pred_fallthru
      _
    // Predicated region
    $region10: #{tpu_custom_call.1} parent=1 // pred_check
      _
    $region11: #{tpu_custom_call.1} parent=1 // pred_check_branch
      %51 = sbr.rel (0) target = $region13
    $region12: #{tpu_custom_call.1} parent=1 // pred_region
      _
    $region13: #{tpu_custom_call.1} parent=1 // pred_fallthru
      _
    // Predicated region
    $region14: #{tpu_custom_call.1} parent=1 // pred_check
      _
    $region15: #{tpu_custom_call.1} parent=1 // pred_check_branch
      %53 = sbr.rel (0) target = $region17
    $region16: #{tpu_custom_call.1} parent=1 // pred_region
      %54 = dma.done [#allocation3], 256
    $region17: #{tpu_custom_call.1} parent=1 // pred_fallthru
      _
    // Predicated region
    $region18: #{tpu_custom_call.1} parent=1 // pred_check
      _
    $region19: #{tpu_custom_call.1} parent=1 // pred_check_branch
      %56 = sbr.rel (0) target = $region21
    $region20: #{tpu_custom_call.1} parent=1 // pred_region
      %57 = dma.done [#allocation6], 256
    $region21: #{tpu_custom_call.1} parent=1 // pred_fallthru
      _
    %s58 = sadd.s32 0, 0
    %p59 = scmp.lt.s32.totalorder %s58, 0
    %s60 = scalar_select %p59, %s58, 0
    %s61 = smul.u32 2, %s60
    %s62 = sadd.s32 0, 0
    %p63 = scmp.lt.s32.totalorder %s62, 0
    %s64 = scalar_select %p63, %s62, 0
    %s65 = smul.u32 2, %s64
    %p66 = scmp.eq.s32.totalorder 0, 0
    // Predicated region
    $region22: #{tpu_custom_call.1} parent=1 // pred_check
      %p67 = pneg %p66
    $region23: #{tpu_custom_call.1} parent=1 // pred_check_branch
      %69 = sbr.rel (%p67) target = $region25
    $region24: #{tpu_custom_call.1} parent=1 // pred_region
      %70 = vst [vmem:[#allocation7] sm:$0xff] 0.0
      %71 = vst [vmem:[#allocation8] sm:$0xff] 0.0
    $region25: #{tpu_custom_call.1} parent=1 // pred_fallthru
      _
    %v72 = vld [vmem:[#allocation2] sm:$0xff]
    %v73 = vld [vmem:[#allocation2 + $0x8] sm:$0xff]
    %v74 = vld [vmem:[#allocation5] sm:$0xff]
    %v75 = vld [vmem:[#allocation5 + $0x8] sm:$0xff]
    %vm76 = vcmp.ne.f32.partialorder %v74, -1.0
    %vm77 = vcmp.ne.f32.partialorder %v75, -1.0
    %v78 = vld [vmem:[%s2] sm:$0x1]
    %v79 = vmax.f32 %v72, 1e-08
    %v80 = vmax.f32 %v73, 1e-08
    %v81 = vlog2.pop %v79
    %v82 = vmul.f32 %v81, 0.6931472
    %v83 = vlog2.pop %v80
    %v84 = vmul.f32 %v83, 0.6931472
    %v85 = vsub.f32 1.0, %v72
    %v86 = vsub.f32 1.0, %v73
    %v87 = vmax.f32 %v85, 1e-08
    %v88 = vmax.f32 %v86, 1e-08
    %v89 = vlog2.pop %v87
    %v90 = vmul.f32 %v89, 0.6931472
    %v91 = vlog2.pop %v88
    %v92 = vmul.f32 %v91, 0.6931472
    %v93 = vmul.f32 %v74, %v82
    %v94 = vmul.f32 %v75, %v84
    %v95 = vsub.f32 1.0, %v74
    %v96 = vsub.f32 1.0, %v75
    %v97 = vmul.f32 %v72, %v95
    %v98 = vmul.f32 %v73, %v96
    %v99 = vmul.f32 %v97, %v90
    %v100 = vmul.f32 %v98, %v92
    %v101 = vadd.f32 %v93, %v99
    %v102 = vadd.f32 %v94, %v100
    %v104 = vlaneseq
    %v105 = vshrl.u32 %v104, 7
    %v106 = vsub.s32 0, %v105
    %v107 = vrot.slane %v78, %v106
    %v109 = vmul.f32 %v101, %v107
    %v110 = vmul.f32 %v102, %v107
    %v111 = vsel %vm76, %v109, 0.0
    %v112 = vsel %vm77, %v110, 0.0
    %v113 = vsel %vm76, 1.0, 0.0
    %v114 = vsel %vm77, 1.0, 0.0
    %v115 = vld [vmem:[#allocation7] sm:$0xff]
    %v116 = vadd.f32 %v111, %v112
    %v117 = vadd.f32 %v115, %v116
    %118 = vst [vmem:[#allocation7] sm:$0xff] %v117
    %v119 = vld [vmem:[#allocation8] sm:$0xff]
    %v120 = vadd.f32 %v113, %v114
    %v121 = vadd.f32 %v119, %v120
    %122 = vst [vmem:[#allocation8] sm:$0xff] %v121
    // Predicated region
    $region26: #{tpu_custom_call.1} parent=1 // pred_check
      _
    $region27: #{tpu_custom_call.1} parent=1 // pred_check_branch
      %124 = sbr.rel (0) target = $region29
    $region28: #{tpu_custom_call.1} parent=1 // pred_region
      %s126 = ssub.s32 128, 128
      %127 = vsyncadd [#allocation4], %s126
      %s129 = sshll.u32 [#allocation7], 4
      %s130 = int_to_ptr.vmem [resolvable:$true] %s129
      %132 = dma.vmem_to_hbm [thread:$0]  %s130, 128, %s3, [#allocation4]
    $region29: #{tpu_custom_call.1} parent=1 // pred_fallthru
      _
    // Predicated region
    $region30: #{tpu_custom_call.1} parent=1 // pred_check
      _
    $region31: #{tpu_custom_call.1} parent=1 // pred_check_branch
      %134 = sbr.rel (0) target = $region33
    $region32: #{tpu_custom_call.1} parent=1 // pred_region
      %s136 = ssub.s32 128, 128
      %137 = vsyncadd [#allocation9], %s136
      %s139 = sshll.u32 [#allocation8], 4
      %s140 = int_to_ptr.vmem [resolvable:$true] %s139
      %142 = dma.vmem_to_hbm [thread:$0]  %s140, 128, %s4, [#allocation9]
    $region33: #{tpu_custom_call.1} parent=1 // pred_fallthru
      _
    // Predicated region
    $region34: #{tpu_custom_call.1} parent=1 // pred_check
      _
    $region35: #{tpu_custom_call.1} parent=1 // pred_check_branch
      %144 = sbr.rel (0) target = $region37
    $region36: #{tpu_custom_call.1} parent=1 // pred_region
      %145 = dma.done [#allocation4], 128
    $region37: #{tpu_custom_call.1} parent=1 // pred_fallthru
      _
    // Predicated region
    $region38: #{tpu_custom_call.1} parent=1 // pred_check
      _
    $region39: #{tpu_custom_call.1} parent=1 // pred_check_branch
      %147 = sbr.rel (0) target = $region41
    $region40: #{tpu_custom_call.1} parent=1 // pred_region
      %148 = dma.done [#allocation9], 128
    $region41: #{tpu_custom_call.1} parent=1 // pred_fallthru
      _
    %149 = vsyncpa [#allocation3], 1
    %150 = vsyncpa [#allocation6], 1
    %151 = vsyncpa [#allocation4], 1
    %152 = vsyncpa [#allocation9], 1

</llo_original>
